<compile_context>
chip_gen: v7x
topology: tpu7x:2x2x1
jax: 0.10.0
libtpu: 0.0.40
codegen_flags: <defaults>
</compile_context>

<pallas_src>
import functools

import jax
import jax.numpy as jnp
from jax import lax
from jax.experimental import pallas as pl
from jax.experimental.pallas import tpu as pltpu


def _round_up(a: int, b: int) -> int:
    return ((a + b - 1) // b) * b


@functools.lru_cache(maxsize=None)
def _tpu_generation() -> int:
    kind = ""
    try:
        kind = jax.devices()[0].device_kind.lower()
    except Exception:
        pass
    for g in (7, 6, 5, 4):
        if f"v{g}" in kind:
            return g
    return 6  # sensible default if the device kind string is unrecognized


@functools.lru_cache(maxsize=None)
def _vmem_budget_bytes() -> int:
    """~75% of physical VMEM: ~96 MiB on v5e/v6e, ~48 MiB on v7x."""
    cap = None
    try:
        cap = int(getattr(pltpu.get_tpu_info(), "vmem_capacity_bytes", 0)) or None
    except Exception:
        cap = None
    if cap is None:
        cap = 64 * 1024 * 1024 if _tpu_generation() >= 7 else 128 * 1024 * 1024
    return (cap * 3) // 4


# ---------------------------------------------------------------------------
# Kernels
# ---------------------------------------------------------------------------
def _linear_kernel_single_k(x_ref, w_ref, o_ref):
    """Whole K in one block: no reduction grid axis, no accumulator RMW."""
    o_ref[...] = lax.dot_general(
        x_ref[...], w_ref[...],
        dimension_numbers=(((1,), (1,)), ((), ())),  # contract last dims (K)
        preferred_element_type=jnp.float32,
    ).astype(o_ref.dtype)


def _linear_kernel_acc_inplace(x_ref, w_ref, o_ref):
    """K tiled; f32 output block used directly as the resident accumulator."""
    k = pl.program_id(2)

    @pl.when(k == 0)
    def _():
        o_ref[...] = jnp.zeros_like(o_ref)

    o_ref[...] += lax.dot_general(
        x_ref[...], w_ref[...],
        dimension_numbers=(((1,), (1,)), ((), ())),
        preferred_element_type=jnp.float32,
    )


def _linear_kernel_acc_scratch(x_ref, w_ref, o_ref, acc_ref):
    """K tiled; low-precision output, accumulate in an f32 VMEM scratch."""
    k = pl.program_id(2)

    @pl.when(k == 0)
    def _():
        acc_ref[...] = jnp.zeros_like(acc_ref)

    acc_ref[...] += lax.dot_general(
        x_ref[...], w_ref[...],
        dimension_numbers=(((1,), (1,)), ((), ())),
        preferred_element_type=jnp.float32,
    )

    @pl.when(k == pl.num_programs(2) - 1)
    def _():
        o_ref[...] = acc_ref[...].astype(o_ref.dtype)


# ---------------------------------------------------------------------------
# Tile selection
# ---------------------------------------------------------------------------
def _pick_tiles(M, N, K, x_item, w_item, out_item, m_blk, n_blk, k_blk, gen, budget):
    # Sublane tile depends on the packed dtype: 8 (f32), 16 (bf16), 32 (int8/fp8).
    sub_m = max(8, 32 // max(x_item, 1))

    if gen >= 7:      # v7x: 64 MiB VMEM, balance ~311 FLOP/byte
        tm_t, tn_t, tk_t = 512, 1024, 1024
    elif gen == 6:    # v6e: 128 MiB VMEM, balance ~656 FLOP/byte
        tm_t, tn_t, tk_t = 1024, 2048, 1024
    else:             # v5e and older: balance ~240 FLOP/byte, push tk instead
        tm_t, tn_t, tk_t = 512, 512, 2048

    if m_blk is not None:
        tm_t = _round_up(m_blk, sub_m)
    if n_blk is not None:
        tn_t = _round_up(n_blk, 128)
    if k_blk is not None:
        tk_t = _round_up(k_blk, 128)

    M_r = _round_up(M, sub_m)
    N_r = _round_up(N, 128)

    tm = min(tm_t, M_r)
    tn = min(tn_t, N_r)

    def fits(bm, bn, bk, k_tiled):
        vmem = 2 * bk * (bm * x_item + bn * w_item)   # double-buffered X, W panels
        vmem += 2 * bm * bn * out_item                # double-buffered output tile
        if k_tiled and out_item < 4:
            vmem += bm * bn * 4                       # f32 accumulator scratch
        return vmem <= budget

    # Small-M (inference) fast path: nm == 1, widen the output tile so the
    # weight streams from HBM exactly once per call.
    if n_blk is None and M_r <= tm_t:
        tm = M_r
        while tn < N_r and tn < 2 * tn_t and fits(tm, 2 * tn, min(tk_t, K), True):
            tn = min(2 * tn, N_r)

    # Prefer consuming the whole K in one pass (no K grid axis -> no per-step
    # accumulator read-modify-write) whenever the panels fit the VMEM budget.
    if k_blk is None and fits(tm, tn, K, False):
        return tm, tn, K

    tk = min(tk_t, _round_up(K, 128))
    while tk > 512 and not fits(tm, tn, tk, True):
        tk = max(512, _round_up(tk // 2, 128))
    while tn > 128 and not fits(tm, tn, tk, True):
        tn = max(128, _round_up(tn // 2, 128))
    while tm > sub_m and not fits(tm, tn, tk, True):
        tm = max(sub_m, _round_up(tm // 2, sub_m))
    while tk > 128 and not fits(tm, tn, tk, True):
        tk = max(128, _round_up(tk // 2, 128))

    if tk >= K:     # collapsed back to a single K block: use the exact K
        tk = K
    return tm, tn, tk


# ---------------------------------------------------------------------------
# Wrapper
# ---------------------------------------------------------------------------
@functools.partial(
    jax.jit, static_argnames=("m_blk", "n_blk", "k_blk", "compute_in_bf16")
)
def linear_pallas(x, weight, *, m_blk=None, n_blk=None, k_blk=None,
                  compute_in_bf16=True):
    """out = x @ weight.T  (no bias), matching torch nn.Linear semantics.

    x:      [..., in_features]
    weight: [out_features, in_features]   (PyTorch layout, consumed as-is)

    compute_in_bf16: cast f32 operands to bf16 for the MXU (f32 accumulation),
    matching the bf16 VNNI/AMX compute of the original module. Set False for
    full-f32 compute.
    """
    out_features, in_features = weight.shape
    assert x.shape[-1] == in_features

    lead_shape = x.shape[:-1]
    x2d = x.reshape(-1, in_features)
    M, K = x2d.shape
    N = out_features
    out_dtype = x.dtype

    w2d = weight
    if compute_in_bf16:
        if x2d.dtype == jnp.float32:
            x2d = x2d.astype(jnp.bfloat16)
        if w2d.dtype == jnp.float32:
            w2d = w2d.astype(jnp.bfloat16)
        # TODO(synk): on v7x an fp8-weight path could add ~2x MXU throughput.

    x_item = jnp.dtype(x2d.dtype).itemsize
    w_item = jnp.dtype(w2d.dtype).itemsize
    out_item = jnp.dtype(out_dtype).itemsize

    gen = _tpu_generation()
    budget = _vmem_budget_bytes()

    tm, tn, tk = _pick_tiles(M, N, K, x_item, w_item, out_item,
                             m_blk, n_blk, k_blk, gen, budget)

    # Only K must be zero-padded for correctness (garbage in a padded K region
    # would pollute valid outputs). M/N remainders use Pallas edge blocks with
    # masked stores, so no full-array pads of X / W are materialized.
    if tk == K:
        nk = 1
    else:
        K_pad = _round_up(K, tk)
        nk = K_pad // tk
        if K_pad != K:
            x2d = jnp.pad(x2d, ((0, 0), (0, K_pad - K)))
            w2d = jnp.pad(w2d, ((0, 0), (0, K_pad - K)))

    nm = pl.cdiv(M, tm)
    nn = pl.cdiv(N, tn)
    n_major = nn > nm   # put the larger parallel axis first (megacore sharding)

    if nk == 1:
        if n_major:
            grid = (nn, nm)
            x_map = lambda j, i: (i, 0)
            w_map = lambda j, i: (j, 0)
            o_map = lambda j, i: (i, j)
        else:
            grid = (nm, nn)
            x_map = lambda i, j: (i, 0)
            w_map = lambda i, j: (j, 0)
            o_map = lambda i, j: (i, j)
        dim_sem = ("parallel", "parallel")
        kernel = _linear_kernel_single_k
        scratch = []
    else:
        if n_major:
            grid = (nn, nm, nk)
            x_map = lambda j, i, k: (i, k)
            w_map = lambda j, i, k: (j, k)
            o_map = lambda j, i, k: (i, j)
        else:
            grid = (nm, nn, nk)
            x_map = lambda i, j, k: (i, k)
            w_map = lambda i, j, k: (j, k)
            o_map = lambda i, j, k: (i, j)
        dim_sem = ("parallel", "parallel", "arbitrary")
        if out_dtype == jnp.float32:
            kernel = _linear_kernel_acc_inplace   # f32 output is the accumulator
            scratch = []
        else:
            kernel = _linear_kernel_acc_scratch
            scratch = [pltpu.VMEM((tm, tn), jnp.float32)]

    grid_spec = pltpu.PrefetchScalarGridSpec(
        num_scalar_prefetch=0,
        grid=grid,
        in_specs=[
            pl.BlockSpec((tm, tk), x_map),
            pl.BlockSpec((tn, tk), w_map),
        ],
        out_specs=pl.BlockSpec((tm, tn), o_map),
        scratch_shapes=scratch,
    )

    cost = pl.CostEstimate(
        flops=2 * M * N * K,
        transcendentals=0,
        bytes_accessed=M * K * x_item + N * K * w_item + M * N * out_item,
    )

    out2d = pl.pallas_call(
        kernel,
        out_shape=jax.ShapeDtypeStruct((M, N), out_dtype),
        grid_spec=grid_spec,
        compiler_params=pltpu.CompilerParams(
            dimension_semantics=dim_sem,
            vmem_limit_bytes=int(budget),
        ),
        cost_estimate=cost,
    )(x2d, w2d)

    return out2d.reshape(*lead_shape, out_features)


# ---------------------------------------------------------------------------
# Self-test
# ---------------------------------------------------------------------------
if __name__ == "__main__":
    key = jax.random.PRNGKey(0)
    kx, kw = jax.random.split(key)

    # Shapes implied by the module: token activations [batch, seq, in_features]
    # against a PyTorch-layout weight [out_features, in_features].
    batch, seq, in_features, out_features = 2, 8, 128, 256
    x = jax.random.normal(kx, (batch, seq, in_features), dtype=jnp.float32)
    weight = (
        jax.random.normal(kw, (out_features, in_features), dtype=jnp.float32)
        * (1.0 / jnp.sqrt(jnp.float32(in_features)))
    )

    # Default path: bf16 MXU compute with f32 accumulation (matches the
    # VNNI/AMX bf16 semantics of the original module).
    out = jax.block_until_ready(linear_pallas(x, weight))
    ref = x @ weight.T
    assert out.shape == (batch, seq, out_features)
    assert out.dtype == x.dtype
    assert jnp.allclose(out, ref, atol=3e-2, rtol=3e-2)

    # Full-f32 path + ragged M/N (exercises edge blocks, no explicit padding).
    x2 = jax.random.normal(kx, (3, 5, 384), dtype=jnp.float32)
    w2 = jax.random.normal(kw, (192, 384), dtype=jnp.float32) * 0.05
    out2 = jax.block_until_ready(linear_pallas(x2, w2, compute_in_bf16=False))
    ref2 = x2 @ w2.T
    assert jnp.allclose(out2, ref2, atol=2e-2, rtol=2e-2)

    # Forced K-tiled accumulator path (k_blk < K).
    x3 = jax.random.normal(kx, (64, 1024), dtype=jnp.float32)
    w3 = jax.random.normal(kw, (256, 1024), dtype=jnp.float32) * 0.03
    out3 = jax.block_until_ready(linear_pallas(x3, w3, k_blk=256))
    ref3 = x3 @ w3.T
    assert jnp.allclose(out3, ref3, atol=5e-2, rtol=5e-2)

    print("KERNEL_OK")
</pallas_src>

<mosaic_0001>
module attributes {stable_mosaic.version = 11 : i64} {
  func.func @_linear_kernel_single_k(%arg0: i32, %arg1: i32, %arg2: memref<16x128xbf16, #tpu.memory_space<vmem>>, %arg3: memref<256x128xbf16, #tpu.memory_space<vmem>>, %arg4: memref<16x256xf32, #tpu.memory_space<vmem>>) attributes {dimension_semantics = [#tpu.dimension_semantics<parallel>, #tpu.dimension_semantics<parallel>], iteration_bounds = array<i64: 1, 1>, scalar_prefetch = 0 : i64, scratch_operands = 0 : i64, tpu.core_type = #tpu.core_type<tc>, window_params = [{transform_indices = @transform_0, window_bounds = array<i64: 16, 128>}, {transform_indices = @transform_1, window_bounds = array<i64: 256, 128>}, {transform_indices = @transform_2, window_bounds = array<i64: 16, 256>}]} {
    %c0 = arith.constant 0 : index
    %c0_0 = arith.constant 0 : index
    %0 = vector.load %arg2[%c0, %c0_0] : memref<16x128xbf16, #tpu.memory_space<vmem>>, vector<16x128xbf16>
    %c0_1 = arith.constant 0 : index
    %c0_2 = arith.constant 0 : index
    %1 = vector.load %arg3[%c0_1, %c0_2] : memref<256x128xbf16, #tpu.memory_space<vmem>>, vector<256x128xbf16>
    %cst = arith.constant dense<0.000000e+00> : vector<16x256xf32>
    %2 = tpu.matmul %0, %1, %cst {dimension_numbers = #tpu.dot_dimension_numbers<[1], [1], [0], [0], [0, 0, 1, 0], [], []>} : vector<16x128xbf16>, vector<256x128xbf16>, vector<16x256xf32> -> vector<16x256xf32>
    %c0_3 = arith.constant 0 : index
    %c0_4 = arith.constant 0 : index
    %3 = vector.load %arg4[%c0_3, %c0_4] : memref<16x256xf32, #tpu.memory_space<vmem>>, vector<16x256xf32>
    tpu.vector_store %arg4[%c0_3, %c0_4], %2 {strides = array<i32>} : memref<16x256xf32, #tpu.memory_space<vmem>>, vector<16x256xf32>,
    return
  }
  func.func @transform_0(%arg0: i32, %arg1: i32) -> (i32, i32) {
    %c0_i32 = arith.constant 0 : i32
    %c0_i32_0 = arith.constant 0 : i32
    return %arg0, %c0_i32 : i32, i32
  }
  func.func @transform_1(%arg0: i32, %arg1: i32) -> (i32, i32) {
    %c0_i32 = arith.constant 0 : i32
    %c0_i32_0 = arith.constant 0 : i32
    return %arg1, %c0_i32 : i32, i32
  }
  func.func @transform_2(%arg0: i32, %arg1: i32) -> (i32, i32) {
    %c0_i32 = arith.constant 0 : i32
    return %arg0, %arg1 : i32, i32
  }
}

</mosaic_0001>

<llo_original>
// kernel: linear_pallas.1
$region0: #{linear_pallas.1}
  #allocation0 [shape = 'u32[]', space=smem, size = 0x4, offset = 0x4, fixed_abs, tag = 'smem constant byte address 0x4 - core index']
  #allocation1 [shape = 'u32[144,128]{1,0:T(1,128)}', space=vmem, size = 0x12000, scoped, tag = 'internal scratch']
  %s0 = inlined_call_operand.hbm [shape: bf16[16,128], index: 0, kind: input, shape index: {}]
  %s1 = inlined_call_operand.hbm [shape: bf16[256,128], index: 1, kind: input, shape index: {}]
  %s2 = inlined_call_operand.hbm [shape: f32[16,256], index: 2, kind: output, shape index: {}]
  %s3 = sld [smem:[#allocation0]]
  $region26: #{linear_pallas.1} parent=0
    _
  %s5 = ssub.s32 1, %s3
  %s6 = scalar_select 0, %s5, %s3
  $region1: #{linear_pallas.1} parent=0
    #allocation2 [shape = 'u8[4096]{0}', space=vmem, size = 0x1000, scoped, tag = 'input window, operand 0, single buffered']
    #allocation3 [shape = 's32[1]{0}', space=sflag, size = 0x4, scoped, tag = 'scoped memory for linear_pallas.1']
    #allocation4 [shape = 's32[1]{0}', space=sflag, size = 0x4, scoped, tag = 'scoped memory for linear_pallas.1']
    #allocation5 [shape = 'u8[65536]{0}', space=vmem, size = 0x10000, scoped, tag = 'input window, operand 1, single buffered']
    #allocation6 [shape = 's32[1]{0}', space=sflag, size = 0x4, scoped, tag = 'scoped memory for linear_pallas.1']
    #allocation7 [shape = 'u8[16384]{0}', space=vmem, size = 0x4000, scoped, tag = 'output window, operand 0, single buffered']
    %7 = vsyncpa [#allocation3], 0
    %8 = vsyncpa [#allocation6], 0
    %9 = vsyncpa [#allocation4], 0
    // Predicated region
    $region2: #{linear_pallas.1} parent=1 // pred_check
      _
    $region3: #{linear_pallas.1} parent=1 // pred_check_branch
      %11 = sbr.rel (0) target = $region5
    $region4: #{linear_pallas.1} parent=1 // pred_region
      %s13 = ssub.s32 128, 128
      %14 = vsyncadd [#allocation3], %s13
      %s15 = sshll.u32 [#allocation2], 4
      %s16 = int_to_ptr.vmem [resolvable:$true] %s15
      %21 = dma.hbm_to_vmem [thread:$0]  %s0, 128, %s16, [#allocation3], 64, 64, 4
    $region5: #{linear_pallas.1} parent=1 // pred_fallthru
      _
    // Predicated region
    $region6: #{linear_pallas.1} parent=1 // pred_check
      _
    $region7: #{linear_pallas.1} parent=1 // pred_check_branch
      %23 = sbr.rel (0) target = $region9
    $region8: #{linear_pallas.1} parent=1 // pred_region
      %s25 = ssub.s32 2048, 2048
      %26 = vsyncadd [#allocation6], %s25
      %s27 = sshll.u32 [#allocation5], 4
      %s28 = int_to_ptr.vmem [resolvable:$true] %s27
      %33 = dma.hbm_to_vmem [thread:$0]  %s1, 2048, %s28, [#allocation6], 64, 64, 4
    $region9: #{linear_pallas.1} parent=1 // pred_fallthru
      _
    // Predicated region
    $region10: #{linear_pallas.1} parent=1 // pred_check
      _
    $region11: #{linear_pallas.1} parent=1 // pred_check_branch
      %35 = sbr.rel (0) target = $region13
    $region12: #{linear_pallas.1} parent=1 // pred_region
      %36 = dma.done [#allocation3], 128
    $region13: #{linear_pallas.1} parent=1 // pred_fallthru
      _
    // Predicated region
    $region14: #{linear_pallas.1} parent=1 // pred_check
      _
    $region15: #{linear_pallas.1} parent=1 // pred_check_branch
      %38 = sbr.rel (0) target = $region17
    $region16: #{linear_pallas.1} parent=1 // pred_region
      %39 = dma.done [#allocation6], 2048
    $region17: #{linear_pallas.1} parent=1 // pred_fallthru
      _
    %v41 = vld [vmem:[#allocation2] sm:$0xf]
    %v42 = vld [vmem:[#allocation2 + $0x4] sm:$0xf]
    %v43 = vld [vmem:[#allocation5] sm:$0xf]
    %v44 = vld [vmem:[#allocation5 + $0x4] sm:$0xf]
    %v45 = vld [vmem:[#allocation5 + $0x8] sm:$0xf]
    %v46 = vld [vmem:[#allocation5 + $0xc] sm:$0xf]
    %v47 = vld [vmem:[#allocation5 + $0x10] sm:$0xf]
    %v48 = vld [vmem:[#allocation5 + $0x14] sm:$0xf]
    %v49 = vld [vmem:[#allocation5 + $0x18] sm:$0xf]
    %v50 = vld [vmem:[#allocation5 + $0x1c] sm:$0xf]
    %v51 = vld [vmem:[#allocation5 + $0x20] sm:$0xf]
    %v52 = vld [vmem:[#allocation5 + $0x24] sm:$0xf]
    %v53 = vld [vmem:[#allocation5 + $0x28] sm:$0xf]
    %v54 = vld [vmem:[#allocation5 + $0x2c] sm:$0xf]
    %v55 = vld [vmem:[#allocation5 + $0x30] sm:$0xf]
    %v56 = vld [vmem:[#allocation5 + $0x34] sm:$0xf]
    %v57 = vld [vmem:[#allocation5 + $0x38] sm:$0xf]
    %v58 = vld [vmem:[#allocation5 + $0x3c] sm:$0xf]
    %v59 = vld [vmem:[#allocation5 + $0x40] sm:$0xf]
    %v60 = vld [vmem:[#allocation5 + $0x44] sm:$0xf]
    %v61 = vld [vmem:[#allocation5 + $0x48] sm:$0xf]
    %v62 = vld [vmem:[#allocation5 + $0x4c] sm:$0xf]
    %v63 = vld [vmem:[#allocation5 + $0x50] sm:$0xf]
    %v64 = vld [vmem:[#allocation5 + $0x54] sm:$0xf]
    %v65 = vld [vmem:[#allocation5 + $0x58] sm:$0xf]
    %v66 = vld [vmem:[#allocation5 + $0x5c] sm:$0xf]
    %v67 = vld [vmem:[#allocation5 + $0x60] sm:$0xf]
    %v68 = vld [vmem:[#allocation5 + $0x64] sm:$0xf]
    %v69 = vld [vmem:[#allocation5 + $0x68] sm:$0xf]
    %v70 = vld [vmem:[#allocation5 + $0x6c] sm:$0xf]
    %v71 = vld [vmem:[#allocation5 + $0x70] sm:$0xf]
    %v72 = vld [vmem:[#allocation5 + $0x74] sm:$0xf]
    %v73 = vld [vmem:[#allocation5 + $0x78] sm:$0xf]
    %v74 = vld [vmem:[#allocation5 + $0x7c] sm:$0xf]
    %v77 = vunpack.c.l.b16 %v41
    %v78 = vunpack.c.l.b16 %v42
    %v79 = vpack.c.b16 %v78, %v77
    %v113 = vunpack.c.l.b16 %v43
    %v114 = vunpack.c.l.b16 %v44
    %v115 = vunpack.c.l.b16 %v45
    %v116 = vunpack.c.l.b16 %v46
    %v117 = vunpack.c.l.b16 %v47
    %v118 = vunpack.c.l.b16 %v48
    %v119 = vunpack.c.l.b16 %v49
    %v120 = vunpack.c.l.b16 %v50
    %v121 = vunpack.c.l.b16 %v51
    %v122 = vunpack.c.l.b16 %v52
    %v123 = vunpack.c.l.b16 %v53
    %v124 = vunpack.c.l.b16 %v54
    %v125 = vunpack.c.l.b16 %v55
    %v126 = vunpack.c.l.b16 %v56
    %v127 = vunpack.c.l.b16 %v57
    %v128 = vunpack.c.l.b16 %v58
    %v129 = vunpack.c.l.b16 %v59
    %v130 = vunpack.c.l.b16 %v60
    %v131 = vunpack.c.l.b16 %v61
    %v132 = vunpack.c.l.b16 %v62
    %v133 = vunpack.c.l.b16 %v63
    %v134 = vunpack.c.l.b16 %v64
    %v135 = vunpack.c.l.b16 %v65
    %v136 = vunpack.c.l.b16 %v66
    %v137 = vunpack.c.l.b16 %v67
    %v138 = vunpack.c.l.b16 %v68
    %v139 = vunpack.c.l.b16 %v69
    %v140 = vunpack.c.l.b16 %v70
    %v141 = vunpack.c.l.b16 %v71
    %v142 = vunpack.c.l.b16 %v72
    %v143 = vunpack.c.l.b16 %v73
    %v144 = vunpack.c.l.b16 %v74
    %v145 = vpack.c.b16 %v114, %v113
    %v146 = vpack.c.b16 %v116, %v115
    %v147 = vpack.c.b16 %v118, %v117
    %v148 = vpack.c.b16 %v120, %v119
    %v149 = vpack.c.b16 %v122, %v121
    %v150 = vpack.c.b16 %v124, %v123
    %v151 = vpack.c.b16 %v126, %v125
    %v152 = vpack.c.b16 %v128, %v127
    %v153 = vpack.c.b16 %v130, %v129
    %v154 = vpack.c.b16 %v132, %v131
    %v155 = vpack.c.b16 %v134, %v133
    %v156 = vpack.c.b16 %v136, %v135
    %v157 = vpack.c.b16 %v138, %v137
    %v158 = vpack.c.b16 %v140, %v139
    %v159 = vpack.c.b16 %v142, %v141
    %v160 = vpack.c.b16 %v144, %v143
    %177 = vmatprep.subr.bf16.mxu0 0
    %178 = vmatpush1.bf16.xpose.msra.mxu0 %v145
    %179 = vmatprep.subr.bf16.mxu0 0
    %180 = vmatpush1.bf16.xpose.msra.mxu0 %v146
    %181 = vmatprep.subr.bf16.mxu0 0
    %182 = vmatpush1.bf16.xpose.msra.mxu0 %v147
    %183 = vmatprep.subr.bf16.mxu0 0
    %184 = vmatpush1.bf16.xpose.msra.mxu0 %v148
    %185 = vmatprep.subr.bf16.mxu0 0
    %186 = vmatpush1.bf16.xpose.msra.mxu0 %v149
    %187 = vmatprep.subr.bf16.mxu0 0
    %188 = vmatpush1.bf16.xpose.msra.mxu0 %v150
    %189 = vmatprep.subr.bf16.mxu0 0
    %190 = vmatpush1.bf16.xpose.msra.mxu0 %v151
    %191 = vmatprep.subr.bf16.mxu0 0
    %192 = vmatpush1.bf16.xpose.msra.mxu0 %v152
    %193 = vmatprep.subr.bf16.mxu0 0
    %194 = vmatpush1.bf16.xpose.msra.mxu0 %v153
    %195 = vmatprep.subr.bf16.mxu0 0
    %196 = vmatpush1.bf16.xpose.msra.mxu0 %v154
    %197 = vmatprep.subr.bf16.mxu0 0
    %198 = vmatpush1.bf16.xpose.msra.mxu0 %v155
    %199 = vmatprep.subr.bf16.mxu0 0
    %200 = vmatpush1.bf16.xpose.msra.mxu0 %v156
    %201 = vmatprep.subr.bf16.mxu0 0
    %202 = vmatpush1.bf16.xpose.msra.mxu0 %v157
    %203 = vmatprep.subr.bf16.mxu0 0
    %204 = vmatpush1.bf16.xpose.msra.mxu0 %v158
    %205 = vmatprep.subr.bf16.mxu0 0
    %206 = vmatpush1.bf16.xpose.msra.mxu0 %v159
    %207 = vmatprep.subr.bf16.mxu0 0
    %208 = vmatpush1.bf16.xpose.msra.mxu0 %v160
    %209 = vmatprep.mubr.bf16.mxu0 0
    %210 = vmatmul.mubr.bf16.gmra.mrb[0].mxu0 %v79
    %v211 = vpop.f32.mrb[0].mxu0
    %v212 = vadd.f32 0.0, %v211
    %v213 = vpop.f32.mrb[0].mxu0
    %v214 = vadd.f32 0.0, %v213
    %v215 = vpop.f32.mrb[0].mxu0
    %v216 = vadd.f32 0.0, %v215
    %v217 = vpop.f32.mrb[0].mxu0
    %v218 = vadd.f32 0.0, %v217
    %219 = vdwg.mxu0
    %220 = vst [vmem:[#allocation7] sm:$0xff] %v212
    %221 = vst [vmem:[#allocation7 + $0x8] sm:$0xff] %v214
    %222 = vst [vmem:[#allocation7 + $0x10] sm:$0xff] %v216
    %223 = vst [vmem:[#allocation7 + $0x18] sm:$0xff] %v218
    // Predicated region
    $region18: #{linear_pallas.1} parent=1 // pred_check
      _
    $region19: #{linear_pallas.1} parent=1 // pred_check_branch
      %225 = sbr.rel (0) target = $region21
    $region20: #{linear_pallas.1} parent=1 // pred_region
      %s227 = ssub.s32 512, 512
      %228 = vsyncadd [#allocation4], %s227
      %s229 = sshll.u32 [#allocation7], 4
      %s230 = int_to_ptr.vmem [resolvable:$true] %s229
      %235 = dma.vmem_to_hbm [thread:$0]  %s230, 512, %s2, [#allocation4], 256, 256, 16
    $region21: #{linear_pallas.1} parent=1 // pred_fallthru
      _
    // Predicated region
    $region22: #{linear_pallas.1} parent=1 // pred_check
      _
    $region23: #{linear_pallas.1} parent=1 // pred_check_branch
      %237 = sbr.rel (0) target = $region25
    $region24: #{linear_pallas.1} parent=1 // pred_region
      %238 = dma.done [#allocation4], 512
    $region25: #{linear_pallas.1} parent=1 // pred_fallthru
      _
    %239 = vsyncpa [#allocation3], 1
    %240 = vsyncpa [#allocation6], 1
    %241 = vsyncpa [#allocation4], 1

</llo_original>
